<compile_context>
chip_gen: v5e
topology: v5e:2x2
jax: 0.10.0
libtpu: 0.0.40
codegen_flags: <defaults>
</compile_context>

<pallas_src>
import jax
import jax.numpy as jnp
from jax.experimental import pallas as pl
from jax.experimental.pallas import tpu as pltpu

EPS = 1e-9  # matches the module default (InsNorm(dim, eps=1e-09))


def _insnorm_kernel(x_ref, scale_ref, o_ref):
    # x_ref:     (rpb, HW)   one row = one (n, c) instance
    # scale_ref: (rpb, 1)    per-row scale for this block
    # o_ref:     (rpb, HW)
    hw = x_ref.shape[-1]
    inv_hw = 1.0 / float(hw)  # compile-time constant: multiply, don't divide

    # Pass 1: mean (per-row, lane reduction on the XLU).
    mean = jnp.sum(x_ref[...].astype(jnp.float32), axis=-1, keepdims=True) * inv_hw

    # Pass 2: biased variance = sum((x-mean)^2)/HW (matches torch.var*(HW-1)/HW).
    # Centered value is consumed inline — not a reused named temp, so Mosaic
    # never needs to materialize a (rpb, HW) scratch tile for it.
    d = x_ref[...].astype(jnp.float32) - mean
    var = jnp.sum(d * d, axis=-1, keepdims=True) * inv_hw

    s = scale_ref[...].astype(jnp.float32)       # (rpb, 1)
    a = s * jax.lax.rsqrt(var + EPS)             # O(rows) EUP+VPU work
    b = s - mean * a                             # folds in shift == scale quirk

    # Pass 3: out = x*a + b  — 2 VPU ops/elem, re-reading x from VMEM (cheap).
    o_ref[...] = (x_ref[...].astype(jnp.float32) * a + b).astype(o_ref.dtype)


def _default_tiling():
    """Pick (target_block_bytes, vmem_limit_bytes) per TPU generation."""
    vmem_cap = 64 * 1024 * 1024  # conservative (v7x-sized) fallback
    try:
        vmem_cap = pltpu.get_tpu_info().vmem_capacity_bytes
    except Exception:
        pass
    if vmem_cap >= 100 * 1024 * 1024:
        # v5e / v6e: 128 MiB physical VMEM — bigger blocks amortize per-step cost
        return 16 * 1024 * 1024, 96 * 1024 * 1024
    # v7x: 64 MiB physical VMEM, 32 MiB scoped default must be raised explicitly
    return 8 * 1024 * 1024, 48 * 1024 * 1024


def insnorm(x, scale, *, target_block_bytes=None, vmem_limit_bytes=None):
    """x: (N, C, H, W) float32; scale: (C,) float32."""
    N, C, H, W = x.shape
    HW = H * W
    rows = N * C

    if target_block_bytes is None or vmem_limit_bytes is None:
        tbb, vlim = _default_tiling()
        target_block_bytes = target_block_bytes or tbb
        vmem_limit_bytes = vmem_limit_bytes or vlim

    # --- tiling: size the (rpb, HW) f32 x-tile to ~target_block_bytes, but
    # also cap rpb so the double-buffered working set fits the VMEM limit.
    # Per in-flight buffer, each row costs: x (HW*4) + out (HW*4) + the
    # (rpb,1) scale block, which pads to (8,128) VMEM tiles -> 512 B/row.
    bytes_per_row = HW * 4
    per_row_vmem = 2 * bytes_per_row + 512
    rpb = max(1, target_block_bytes // bytes_per_row)
    budget = int(0.75 * vmem_limit_bytes)            # headroom for compiler scratch
    rpb = min(rpb, budget // (2 * per_row_vmem))     # x2 for double buffering
    rpb = max(8, (rpb // 8) * 8)                     # sublane-aligned, >= 8 rows
    if rpb >= rows:
        rpb = rows                                   # single block = full array dims

    # TODO(synk): extreme HW (>~1.5M f32 elems per instance) overflows VMEM even
    # with an 8-row block; a chunked running-sum/sumsq reduction over HW would
    # be needed for that regime. Not implemented here.

    x2d = x.reshape(rows, HW)                        # metadata-only reshape
    # per-row scale: row r corresponds to channel r % C (rows*4 bytes, negligible)
    scale_rows = jnp.tile(scale.astype(x.dtype), N).reshape(rows, 1)

    # Ragged rows handled by Pallas boundary blocks: garbage OOB reads are
    # row-local, OOB writes are dropped — no wrapper pad / slice copies.
    grid = (pl.cdiv(rows, rpb),)

    out2d = pl.pallas_call(
        _insnorm_kernel,
        out_shape=jax.ShapeDtypeStruct((rows, HW), x.dtype),
        grid_spec=pltpu.PrefetchScalarGridSpec(
            num_scalar_prefetch=0,
            grid=grid,
            in_specs=[
                pl.BlockSpec((rpb, HW), lambda i: (i, 0)),
                pl.BlockSpec((rpb, 1), lambda i: (i, 0)),   # small per-block DMA
            ],
            out_specs=pl.BlockSpec((rpb, HW), lambda i: (i, 0)),
        ),
        compiler_params=pltpu.CompilerParams(
            # purely data-parallel grid: lets v7x shard blocks across both TCs
            dimension_semantics=("parallel",),
            vmem_limit_bytes=vmem_limit_bytes,
        ),
    )(x2d, scale_rows)

    return out2d.reshape(N, C, H, W)


def insnorm_reference(x, scale):
    """Pure-JAX reference matching the PyTorch forward exactly."""
    N, C, H, W = x.shape
    hw = H * W
    vec = x.reshape(N, C, hw)
    mean = jnp.mean(vec, axis=2)[:, :, None, None]
    var_unbiased = jnp.var(vec, axis=2, ddof=1)[:, :, None, None]
    var = var_unbiased * ((hw - 1) / float(hw))
    s = scale[None, :, None, None]
    out = (x - mean) / jnp.sqrt(var + EPS)
    return out * s + s  # shift broadcast == scale, as in the original module


if __name__ == "__main__":
    key = jax.random.PRNGKey(0)
    kx, ks, kx2, ks2 = jax.random.split(key, 4)

    # --- main test: shapes from the module's typical use ---
    N, C, H, W = 2, 4, 16, 16
    x = jax.random.normal(kx, (N, C, H, W), dtype=jnp.float32)
    # scale.data.uniform_() -> U[0, 1); shift is zero-inited but unused in forward
    scale = jax.random.uniform(ks, (C,), dtype=jnp.float32)

    out = jax.block_until_ready(insnorm(x, scale))
    ref = insnorm_reference(x, scale)
    assert out.shape == (N, C, H, W)
    assert jnp.max(jnp.abs(out - ref)) < 1e-4, "mismatch vs reference"

    # --- ragged-rows test: N*C = 15 not divisible by rpb=8, exercises the
    # Pallas boundary-block path (no wrapper pad / output slice) ---
    N2, C2, H2, W2 = 3, 5, 8, 8
    x2 = jax.random.normal(kx2, (N2, C2, H2, W2), dtype=jnp.float32)
    scale2 = jax.random.uniform(ks2, (C2,), dtype=jnp.float32)
    out2 = jax.block_until_ready(insnorm(x2, scale2, target_block_bytes=1))
    ref2 = insnorm_reference(x2, scale2)
    assert out2.shape == (N2, C2, H2, W2)
    assert jnp.max(jnp.abs(out2 - ref2)) < 1e-4, "ragged-rows mismatch vs reference"

    print("KERNEL_OK")
</pallas_src>

<mosaic_0001>
module attributes {stable_mosaic.version = 11 : i64} {
  func.func @_insnorm_kernel(%arg0: i32, %arg1: memref<8x256xf32, #tpu.memory_space<vmem>>, %arg2: memref<8x1xf32, #tpu.memory_space<vmem>>, %arg3: memref<8x256xf32, #tpu.memory_space<vmem>>) attributes {dimension_semantics = [#tpu.dimension_semantics<parallel>], iteration_bounds = array<i64: 1>, scalar_prefetch = 0 : i64, scratch_operands = 0 : i64, tpu.core_type = #tpu.core_type<tc>, window_params = [{transform_indices = @transform_0, window_bounds = array<i64: 8, 256>}, {transform_indices = @transform_1, window_bounds = array<i64: 8, 1>}, {transform_indices = @transform_2, window_bounds = array<i64: 8, 256>}]} {
    %c0 = arith.constant 0 : index
    %c0_0 = arith.constant 0 : index
    %0 = vector.load %arg1[%c0, %c0_0] : memref<8x256xf32, #tpu.memory_space<vmem>>, vector<8x256xf32>
    %cst = arith.constant dense<0.000000e+00> : vector<8xf32>
    %1 = vector.multi_reduction <add>, %0, %cst [1] : vector<8x256xf32> to vector<8xf32>
    %2 = vector.shape_cast %1 : vector<8xf32> to vector<8x1xf32>
    %cst_1 = arith.constant 3.906250e-03 : f32
    %3 = vector.broadcast %cst_1 : f32 to vector<8x1xf32>
    %4 = arith.mulf %2, %3 : vector<8x1xf32>
    %c0_2 = arith.constant 0 : index
    %c0_3 = arith.constant 0 : index
    %5 = vector.load %arg1[%c0_2, %c0_3] : memref<8x256xf32, #tpu.memory_space<vmem>>, vector<8x256xf32>
    %6 = vector.broadcast %4 : vector<8x1xf32> to vector<8x256xf32>
    %7 = arith.subf %5, %6 : vector<8x256xf32>
    %8 = arith.mulf %7, %7 : vector<8x256xf32>
    %cst_4 = arith.constant dense<0.000000e+00> : vector<8xf32>
    %9 = vector.multi_reduction <add>, %8, %cst_4 [1] : vector<8x256xf32> to vector<8xf32>
    %10 = vector.shape_cast %9 : vector<8xf32> to vector<8x1xf32>
    %cst_5 = arith.constant 3.906250e-03 : f32
    %11 = vector.broadcast %cst_5 : f32 to vector<8x1xf32>
    %12 = arith.mulf %10, %11 : vector<8x1xf32>
    %c0_6 = arith.constant 0 : index
    %c0_7 = arith.constant 0 : index
    %13 = vector.load %arg2[%c0_6, %c0_7] : memref<8x1xf32, #tpu.memory_space<vmem>>, vector<8x1xf32>
    %cst_8 = arith.constant 9.99999971E-10 : f32
    %14 = vector.broadcast %cst_8 : f32 to vector<8x1xf32>
    %15 = arith.addf %12, %14 : vector<8x1xf32>
    %16 = math.rsqrt %15 : vector<8x1xf32>
    %17 = arith.mulf %13, %16 : vector<8x1xf32>
    %18 = arith.mulf %4, %17 : vector<8x1xf32>
    %19 = arith.subf %13, %18 : vector<8x1xf32>
    %c0_9 = arith.constant 0 : index
    %c0_10 = arith.constant 0 : index
    %20 = vector.load %arg1[%c0_9, %c0_10] : memref<8x256xf32, #tpu.memory_space<vmem>>, vector<8x256xf32>
    %21 = vector.broadcast %17 : vector<8x1xf32> to vector<8x256xf32>
    %22 = arith.mulf %20, %21 : vector<8x256xf32>
    %23 = vector.broadcast %19 : vector<8x1xf32> to vector<8x256xf32>
    %24 = arith.addf %22, %23 : vector<8x256xf32>
    %c0_11 = arith.constant 0 : index
    %c0_12 = arith.constant 0 : index
    %25 = vector.load %arg3[%c0_11, %c0_12] : memref<8x256xf32, #tpu.memory_space<vmem>>, vector<8x256xf32>
    tpu.vector_store %arg3[%c0_11, %c0_12], %24 {strides = array<i32>} : memref<8x256xf32, #tpu.memory_space<vmem>>, vector<8x256xf32>,
    return
  }
  func.func @transform_0(%arg0: i32) -> (i32, i32) {
    %c0_i32 = arith.constant 0 : i32
    %c0_i32_0 = arith.constant 0 : i32
    return %arg0, %c0_i32 : i32, i32
  }
  func.func @transform_1(%arg0: i32) -> (i32, i32) {
    %c0_i32 = arith.constant 0 : i32
    %c0_i32_0 = arith.constant 0 : i32
    return %arg0, %c0_i32 : i32, i32
  }
  func.func @transform_2(%arg0: i32) -> (i32, i32) {
    %c0_i32 = arith.constant 0 : i32
    %c0_i32_0 = arith.constant 0 : i32
    return %arg0, %c0_i32 : i32, i32
  }
}

</mosaic_0001>

<llo_original>
// kernel: tpu_custom_call.1
$region0: #{tpu_custom_call.1}
  #allocation0 [shape = 'u32[]', space=smem, size = 0x4, offset = 0x4, fixed_abs, tag = 'smem constant byte address 0x4 - core index']
  #allocation1 [shape = 'u32[72,128]{1,0:T(1,128)}', space=vmem, size = 0x9000, scoped, tag = 'internal scratch']
  %s0 = inlined_call_operand.hbm [shape: f32[8,256], index: 0, kind: input, shape index: {}]
  %s1 = inlined_call_operand.vmem [shape: f32[8,1], index: 1, kind: input, shape index: {}]
  %s2 = inlined_call_operand.hbm [shape: f32[8,256], index: 2, kind: output, shape index: {}]
  %s3 = sld [smem:[#allocation0]]
  $region22: #{tpu_custom_call.1} parent=0
    _
  %s5 = ssub.s32 1, %s3
  %s6 = scalar_select 0, %s5, %s3
  $region1: #{tpu_custom_call.1} parent=0
    #allocation2 [shape = 'u8[8192]{0}', space=vmem, size = 0x2000, scoped, tag = 'input window, operand 0, single buffered']
    #allocation3 [shape = 's32[1]{0}', space=sflag, size = 0x4, scoped, tag = 'scoped memory for tpu_custom_call.1']
    #allocation4 [shape = 's32[1]{0}', space=sflag, size = 0x4, scoped, tag = 'scoped memory for tpu_custom_call.1']
    #allocation5 [shape = 'u8[8192]{0}', space=vmem, size = 0x2000, scoped, tag = 'output window, operand 0, single buffered']
    %7 = vsyncpa [#allocation3], 0
    %8 = vsyncpa [#allocation4], 0
    // Predicated region
    $region2: #{tpu_custom_call.1} parent=1 // pred_check
      _
    $region3: #{tpu_custom_call.1} parent=1 // pred_check_branch
      %10 = sbr.rel (0) target = $region5
    $region4: #{tpu_custom_call.1} parent=1 // pred_region
      %12 = vsyncadd [#allocation3], 0
      %s14 = sshll.u32 %s0, 4
      %s15 = int_to_ptr.hbm [resolvable:$true] %s14
      %s16 = sshll.u32 [#allocation2], 4
      %s17 = int_to_ptr.vmem [resolvable:$true] %s16
      %19 = dma.hbm_to_vmem [thread:$0]  %s15, 256, %s17, [#allocation3]
    $region5: #{tpu_custom_call.1} parent=1 // pred_fallthru
      _
    // Predicated region
    $region6: #{tpu_custom_call.1} parent=1 // pred_check
      _
    $region7: #{tpu_custom_call.1} parent=1 // pred_check_branch
      %21 = sbr.rel (0) target = $region9
    $region8: #{tpu_custom_call.1} parent=1 // pred_region
      _
    $region9: #{tpu_custom_call.1} parent=1 // pred_fallthru
      _
    // Predicated region
    $region10: #{tpu_custom_call.1} parent=1 // pred_check
      _
    $region11: #{tpu_custom_call.1} parent=1 // pred_check_branch
      %23 = sbr.rel (0) target = $region13
    $region12: #{tpu_custom_call.1} parent=1 // pred_region
      %25 = dma.done [#allocation3], 256
    $region13: #{tpu_custom_call.1} parent=1 // pred_fallthru
      _
    %v26 = vld [vmem:[#allocation2] sm:$0xff]
    %v27 = vld [vmem:[#allocation2 + $0x8] sm:$0xff]
    %v28 = vadd.f32 %v26, %v27
    %29 = vadd.xlane.f32.xlu0 %v28
    %v30 = vpop.xlane.xlu0 %29
    %v31 = vmul.f32 %v30, 0.00390625
    %v32 = vsub.f32 %v26, %v31
    %v33 = vsub.f32 %v27, %v31
    %v34 = vmul.f32 %v32, %v32
    %v35 = vmul.f32 %v33, %v33
    %v36 = vadd.f32 %v34, %v35
    %37 = vadd.xlane.f32.xlu0 %v36
    %v38 = vpop.xlane.xlu0 %37
    %v39 = vmul.f32 %v38, 0.00390625
    %v40 = vld [vmem:[%s1] sm:$0xff]
    %v41 = vadd.f32 %v39, 1e-09
    %v42 = vrsqrt.pop %v41
    %v43 = vmul.f32 %v42, %v41
    %v44 = vmul.f32 %v43, %v42
    %v45 = vmul.f32 0.5, %v44
    %v46 = vsub.f32 1.5, %v45
    %v47 = vmul.f32 %v42, %v46
    %vm48 = vweird.f32 %v41
    %vm49 = vweird.f32 %v42
    %vm50 = vmor %vm48, %vm49
    %v51 = vsel %vm50, %v42, %v47
    %v52 = vmul.f32 %v40, %v51
    %v53 = vmul.f32 %v31, %v52
    %v54 = vsub.f32 %v40, %v53
    %56 = vset.pattern.permute.xlu0 0
    %57 = vperm.xlu0 %56, %v52
    %v58 = vpop.permute.xlu0 %57
    %v60 = vmul.f32 %v26, %v58
    %v61 = vmul.f32 %v27, %v58
    %63 = vset.pattern.permute.xlu0 0
    %64 = vperm.xlu0 %63, %v54
    %v65 = vpop.permute.xlu0 %64
    %v67 = vadd.f32 %v60, %v65
    %v68 = vadd.f32 %v61, %v65
    %69 = vst [vmem:[#allocation5] sm:$0xff] %v67
    %70 = vst [vmem:[#allocation5 + $0x8] sm:$0xff] %v68
    // Predicated region
    $region14: #{tpu_custom_call.1} parent=1 // pred_check
      _
    $region15: #{tpu_custom_call.1} parent=1 // pred_check_branch
      %72 = sbr.rel (0) target = $region17
    $region16: #{tpu_custom_call.1} parent=1 // pred_region
      %74 = vsyncadd [#allocation4], 0
      %s76 = sshll.u32 [#allocation5], 4
      %s77 = int_to_ptr.vmem [resolvable:$true] %s76
      %s78 = sshll.u32 %s2, 4
      %s79 = int_to_ptr.hbm [resolvable:$true] %s78
      %81 = dma.vmem_to_hbm [thread:$0]  %s77, 256, %s79, [#allocation4]
    $region17: #{tpu_custom_call.1} parent=1 // pred_fallthru
      _
    // Predicated region
    $region18: #{tpu_custom_call.1} parent=1 // pred_check
      _
    $region19: #{tpu_custom_call.1} parent=1 // pred_check_branch
      %83 = sbr.rel (0) target = $region21
    $region20: #{tpu_custom_call.1} parent=1 // pred_region
      %85 = dma.done [#allocation4], 256
    $region21: #{tpu_custom_call.1} parent=1 // pred_fallthru
      _
    %86 = vsyncpa [#allocation3], 1
    %87 = vsyncpa [#allocation4], 1

</llo_original>
